<compile_context>
chip_gen: v5e
topology: v5e:2x2
jax: 0.10.0
libtpu: 0.0.40
codegen_flags: <defaults>
</compile_context>

<pallas_src>
import functools

import jax
import jax.numpy as jnp
from jax import lax
from jax.experimental import pallas as pl
from jax.experimental.pallas import tpu as pltpu

DROPOUT_P = 0.1      # p passed to the module constructor
NUM_CLASSES = 3
OUT_PAD = 128        # lane-dense padded output width


def _head_kernel(seed_ref, x_ref, w_ref, b_ref, o_ref, *,
                 dropout_p, tile_rows, hidden):
    """Dropout (training-mode, inverted scaling) + Linear on one batch tile."""
    x = x_ref[...]

    if dropout_p > 0.0:
        pid = pl.program_id(0)
        seed = seed_ref[0].astype(jnp.uint32)

        # Global element index -> stateless counter-based PRNG (splitmix32-ish).
        rows = lax.broadcasted_iota(jnp.int32, x.shape, 0)
        cols = lax.broadcasted_iota(jnp.int32, x.shape, 1)
        counter = ((rows + pid * tile_rows) * hidden + cols).astype(jnp.uint32)

        h = counter ^ (seed * jnp.uint32(0x9E3779B9))
        h = (h ^ (h >> 16)) * jnp.uint32(0x7FEB352D)
        h = (h ^ (h >> 15)) * jnp.uint32(0x846CA68B)
        h = h ^ (h >> 16)

        # drop element iff uniform-u32 < p * 2^32 (clamped to avoid overflow)
        threshold = jnp.uint32(min(int(round(dropout_p * (2 ** 32))), 2 ** 32 - 1))
        scale = 1.0 / (1.0 - dropout_p)
        # fused scale-into-mask: one select + one multiply
        mask = jnp.where(h >= threshold, jnp.float32(scale), jnp.float32(0.0))
        # f32 elementwise math (v5e has no bf16 VALU), back to input dtype for MXU
        x = (x.astype(jnp.float32) * mask).astype(x_ref.dtype)

    out = jnp.dot(x, w_ref[...], preferred_element_type=jnp.float32)
    o_ref[...] = (out + b_ref[...]).astype(o_ref.dtype)


def classifier_head(pooler_output, weight, bias, seed, *,
                    dropout_p=DROPOUT_P, tile_rows=512):
    """pooler_output: (B, H); weight: (H, 3); bias: (3,); seed: (1,) int32."""
    B, H = pooler_output.shape
    O = weight.shape[1]

    # Lane-pad the tiny output dim so stores are unmasked full-lane vst.
    w_pad = jnp.zeros((H, OUT_PAD), weight.dtype).at[:, :O].set(weight)
    b_pad = jnp.zeros((1, OUT_PAD), jnp.float32).at[:, :O].set(
        bias.astype(jnp.float32))

    # Batch tile: big enough to hide per-step overhead, small enough for
    # v7x's 64 MiB VMEM (2 x TB x H x itemsize per double-buffered input).
    TB = min(tile_rows, B)
    grid = (pl.cdiv(B, TB),)

    kernel = functools.partial(_head_kernel, dropout_p=dropout_p,
                               tile_rows=TB, hidden=H)

    itemsize = pooler_output.dtype.itemsize
    out = pl.pallas_call(
        kernel,
        out_shape=jax.ShapeDtypeStruct((B, OUT_PAD), jnp.float32),
        grid_spec=pltpu.PrefetchScalarGridSpec(
            num_scalar_prefetch=1,            # seed lands in SMEM
            grid=grid,
            in_specs=[
                pl.BlockSpec((TB, H), lambda i, seed: (i, 0)),      # streamed
                pl.BlockSpec((H, OUT_PAD), lambda i, seed: (0, 0)),  # resident
                pl.BlockSpec((1, OUT_PAD), lambda i, seed: (0, 0)),  # resident
            ],
            out_specs=pl.BlockSpec((TB, OUT_PAD), lambda i, seed: (i, 0)),
        ),
        compiler_params=pltpu.CompilerParams(
            dimension_semantics=("parallel",)),   # megacore on v7x
        cost_estimate=pl.CostEstimate(
            flops=2 * B * H * OUT_PAD,
            transcendentals=0,
            bytes_accessed=(B * H * itemsize
                            + H * OUT_PAD * weight.dtype.itemsize
                            + B * OUT_PAD * 4),
        ),
    )(seed, pooler_output, w_pad, b_pad)

    return out[:, :O]


if __name__ == "__main__":
    # Small, deterministic setup: batch=2, linear_input_size (hidden) = 32.
    B, H = 2, 32

    key = jax.random.PRNGKey(0)
    k_pool, k_w, k_b = jax.random.split(key, 3)

    # Stand-in for the backbone's pooler_output (normally tanh-activated).
    pooler_output = jnp.tanh(jax.random.normal(k_pool, (B, H), dtype=jnp.float32))

    # nn.Linear(H, 3) parameters; PyTorch stores weight as (3, H), we keep the
    # transposed (H, 3) layout so the kernel computes x @ W + b on the MXU.
    bound = 1.0 / (H ** 0.5)
    weight = jax.random.uniform(k_w, (H, NUM_CLASSES), jnp.float32, -bound, bound)
    bias = jax.random.uniform(k_b, (NUM_CLASSES,), jnp.float32, -bound, bound)

    seed = jnp.array([42], dtype=jnp.int32)

    out = classifier_head(pooler_output, weight, bias, seed)
    out = jax.block_until_ready(out)
    assert out.shape == (B, NUM_CLASSES)
    assert out.dtype == jnp.float32
    assert bool(jnp.all(jnp.isfinite(out)))
    print("KERNEL_OK")
</pallas_src>

<mosaic_0001>
module attributes {stable_mosaic.version = 11 : i64} {
  func.func @_head_kernel(%arg0: i32, %arg1: memref<1xi32, #tpu.memory_space<smem>>, %arg2: memref<2x32xf32, #tpu.memory_space<vmem>>, %arg3: memref<32x128xf32, #tpu.memory_space<vmem>>, %arg4: memref<1x128xf32, #tpu.memory_space<vmem>>, %arg5: memref<2x128xf32, #tpu.memory_space<vmem>>) attributes {dimension_semantics = [#tpu.dimension_semantics<parallel>], iteration_bounds = array<i64: 1>, scalar_prefetch = 1 : i64, scratch_operands = 0 : i64, tpu.core_type = #tpu.core_type<tc>, window_params = [{transform_indices = @transform_0, window_bounds = array<i64: 2, 32>}, {pipeline_mode = #tpu.pipeline_mode<synchronous>, transform_indices = @transform_1, window_bounds = array<i64: 32, 128>}, {pipeline_mode = #tpu.pipeline_mode<synchronous>, transform_indices = @transform_2, window_bounds = array<i64: 1, 128>}, {transform_indices = @transform_3, window_bounds = array<i64: 2, 128>}]} {
    %c0 = arith.constant 0 : index
    %c0_0 = arith.constant 0 : index
    %0 = vector.load %arg2[%c0, %c0_0] : memref<2x32xf32, #tpu.memory_space<vmem>>, vector<2x32xf32>
    %c0_1 = arith.constant 0 : index
    %1 = memref.load %arg1[%c0_1] : memref<1xi32, #tpu.memory_space<smem>>
    %2 = tpu.iota {dimensions = array<i32: 0>} : vector<2x32xi32>
    %3 = tpu.iota {dimensions = array<i32: 1>} : vector<2x32xi32>
    %c2_i32 = arith.constant 2 : i32
    %4 = arith.muli %arg0, %c2_i32 : i32
    %5 = vector.broadcast %4 : i32 to vector<2x32xi32>
    %6 = arith.addi %2, %5 : vector<2x32xi32>
    %c32_i32 = arith.constant 32 : i32
    %7 = vector.broadcast %c32_i32 : i32 to vector<2x32xi32>
    %8 = arith.muli %6, %7 : vector<2x32xi32>
    %9 = arith.addi %8, %3 : vector<2x32xi32>
    %c-1640531527_i32 = arith.constant -1640531527 : i32
    %10 = arith.muli %1, %c-1640531527_i32 : i32
    %11 = vector.broadcast %10 : i32 to vector<2x32xi32>
    %12 = arith.xori %9, %11 : vector<2x32xi32>
    %c16_i32 = arith.constant 16 : i32
    %13 = vector.broadcast %c16_i32 : i32 to vector<2x32xi32>
    %14 = arith.shrui %12, %13 : vector<2x32xi32>
    %15 = arith.xori %12, %14 : vector<2x32xi32>
    %c2146121005_i32 = arith.constant 2146121005 : i32
    %16 = vector.broadcast %c2146121005_i32 : i32 to vector<2x32xi32>
    %17 = arith.muli %15, %16 : vector<2x32xi32>
    %c15_i32 = arith.constant 15 : i32
    %18 = vector.broadcast %c15_i32 : i32 to vector<2x32xi32>
    %19 = arith.shrui %17, %18 : vector<2x32xi32>
    %20 = arith.xori %17, %19 : vector<2x32xi32>
    %c-2073254261_i32 = arith.constant -2073254261 : i32
    %21 = vector.broadcast %c-2073254261_i32 : i32 to vector<2x32xi32>
    %22 = arith.muli %20, %21 : vector<2x32xi32>
    %c16_i32_2 = arith.constant 16 : i32
    %23 = vector.broadcast %c16_i32_2 : i32 to vector<2x32xi32>
    %24 = arith.shrui %22, %23 : vector<2x32xi32>
    %25 = arith.xori %22, %24 : vector<2x32xi32>
    %c429496730_i32 = arith.constant 429496730 : i32
    %26 = vector.broadcast %c429496730_i32 : i32 to vector<2x32xi32>
    %27 = arith.cmpi uge, %25, %26 : vector<2x32xi32>
    %cst = arith.constant 1.11111116 : f32
    %cst_3 = arith.constant 0.000000e+00 : f32
    %28 = vector.broadcast %cst : f32 to vector<2x32xf32>
    %29 = vector.broadcast %cst_3 : f32 to vector<2x32xf32>
    %30 = arith.select %27, %28, %29 : vector<2x32xi1>, vector<2x32xf32>
    %31 = arith.mulf %0, %30 : vector<2x32xf32>
    %c0_4 = arith.constant 0 : index
    %c0_5 = arith.constant 0 : index
    %32 = vector.load %arg3[%c0_4, %c0_5] : memref<32x128xf32, #tpu.memory_space<vmem>>, vector<32x128xf32>
    %cst_6 = arith.constant dense<0.000000e+00> : vector<2x128xf32>
    %33 = tpu.matmul %31, %32, %cst_6 {dimension_numbers = #tpu.dot_dimension_numbers<[1], [0], [0], [1], [0, 0, 1, 1], [], []>} : vector<2x32xf32>, vector<32x128xf32>, vector<2x128xf32> -> vector<2x128xf32>
    %c0_7 = arith.constant 0 : index
    %c0_8 = arith.constant 0 : index
    %34 = vector.load %arg4[%c0_7, %c0_8] : memref<1x128xf32, #tpu.memory_space<vmem>>, vector<1x128xf32>
    %35 = vector.broadcast %34 : vector<1x128xf32> to vector<2x128xf32>
    %36 = arith.addf %33, %35 : vector<2x128xf32>
    %c0_9 = arith.constant 0 : index
    %c0_10 = arith.constant 0 : index
    %37 = vector.load %arg5[%c0_9, %c0_10] : memref<2x128xf32, #tpu.memory_space<vmem>>, vector<2x128xf32>
    tpu.vector_store %arg5[%c0_9, %c0_10], %36 {strides = array<i32>} : memref<2x128xf32, #tpu.memory_space<vmem>>, vector<2x128xf32>,
    return
  }
  func.func @transform_0(%arg0: i32, %arg1: memref<1xi32, #tpu.memory_space<smem>>) -> (i32, i32) {
    %c0_i32 = arith.constant 0 : i32
    %c0_i32_0 = arith.constant 0 : i32
    return %arg0, %c0_i32 : i32, i32
  }
  func.func @transform_1(%arg0: i32, %arg1: memref<1xi32, #tpu.memory_space<smem>>) -> (i32, i32) {
    %c0_i32 = arith.constant 0 : i32
    %c0_i32_0 = arith.constant 0 : i32
    %c0_i32_1 = arith.constant 0 : i32
    return %c0_i32, %c0_i32_0 : i32, i32
  }
  func.func @transform_2(%arg0: i32, %arg1: memref<1xi32, #tpu.memory_space<smem>>) -> (i32, i32) {
    %c0_i32 = arith.constant 0 : i32
    %c0_i32_0 = arith.constant 0 : i32
    %c0_i32_1 = arith.constant 0 : i32
    return %c0_i32, %c0_i32_0 : i32, i32
  }
  func.func @transform_3(%arg0: i32, %arg1: memref<1xi32, #tpu.memory_space<smem>>) -> (i32, i32) {
    %c0_i32 = arith.constant 0 : i32
    %c0_i32_0 = arith.constant 0 : i32
    return %arg0, %c0_i32 : i32, i32
  }
}

</mosaic_0001>

<llo_original>
// kernel: tpu_custom_call.1
$region0: #{tpu_custom_call.1}
  #allocation0 [shape = 'u32[]', space=smem, size = 0x4, offset = 0x4, fixed_abs, tag = 'smem constant byte address 0x4 - core index']
  #allocation1 [shape = 'u32[72,128]{1,0:T(1,128)}', space=vmem, size = 0x9000, scoped, tag = 'internal scratch']
  #allocation2 [shape = 's32[1]{0}', space=sflag, size = 0x4, scoped, tag = 'scoped memory for tpu_custom_call.1']
  #allocation3 [shape = 's32[1]{0:T(128)S(6)}', space=smem, size = 0x200, scoped, tag = 'prefetched SMEM operand 0']
  %s0 = inlined_call_operand.<no memory space> [shape: s32[1], index: 0, kind: input, shape index: {}]
  %s1 = inlined_call_operand.vmem [shape: f32[2,32], index: 1, kind: input, shape index: {}]
  %s2 = inlined_call_operand.hbm [shape: f32[32,128], index: 2, kind: input, shape index: {}]
  %s3 = inlined_call_operand.vmem [shape: f32[1,128], index: 3, kind: input, shape index: {}]
  %s4 = inlined_call_operand.hbm [shape: f32[2,128], index: 4, kind: output, shape index: {}]
  %s5 = sld [smem:[#allocation0]]
  $region26: #{tpu_custom_call.1} parent=0
    _
  %s7 = ssub.s32 1, %s5
  %s8 = scalar_select 0, %s7, %s5
  %9 = sst [smem:[#allocation3]] %s0
  $region1: #{tpu_custom_call.1} parent=0
    #allocation4 [shape = 'u8[16384]{0}', space=vmem, size = 0x4000, scoped, tag = 'input window, operand 2, single buffered']
    #allocation5 [shape = 's32[1]{0}', space=sflag, size = 0x4, scoped, tag = 'scoped memory for tpu_custom_call.1']
    #allocation6 [shape = 's32[1]{0}', space=sflag, size = 0x4, scoped, tag = 'scoped memory for tpu_custom_call.1']
    #allocation7 [shape = 'u8[1024]{0}', space=vmem, size = 0x400, scoped, tag = 'output window, operand 0, single buffered']
    %10 = vsyncpa [#allocation5], 0
    %11 = vsyncpa [#allocation6], 0
    // Predicated region
    $region2: #{tpu_custom_call.1} parent=1 // pred_check
      _
    $region3: #{tpu_custom_call.1} parent=1 // pred_check_branch
      %13 = sbr.rel (0) target = $region5
    $region4: #{tpu_custom_call.1} parent=1 // pred_region
      _
    $region5: #{tpu_custom_call.1} parent=1 // pred_fallthru
      _
    // Predicated region
    $region6: #{tpu_custom_call.1} parent=1 // pred_check
      _
    $region7: #{tpu_custom_call.1} parent=1 // pred_check_branch
      %15 = sbr.rel (0) target = $region9
    $region8: #{tpu_custom_call.1} parent=1 // pred_region
      %17 = vsyncadd [#allocation5], 0
      %s18 = sshll.u32 %s2, 4
      %s19 = int_to_ptr.hbm [resolvable:$true] %s18
      %s20 = sshll.u32 [#allocation4], 4
      %s21 = int_to_ptr.vmem [resolvable:$true] %s20
      %26 = dma.hbm_to_vmem [thread:$0]  %s19, 512, %s21, [#allocation5], 128, 128, 8
    $region9: #{tpu_custom_call.1} parent=1 // pred_fallthru
      _
    // Predicated region
    $region10: #{tpu_custom_call.1} parent=1 // pred_check
      _
    $region11: #{tpu_custom_call.1} parent=1 // pred_check_branch
      %28 = sbr.rel (0) target = $region13
    $region12: #{tpu_custom_call.1} parent=1 // pred_region
      _
    $region13: #{tpu_custom_call.1} parent=1 // pred_fallthru
      _
    // Predicated region
    $region14: #{tpu_custom_call.1} parent=1 // pred_check
      _
    $region15: #{tpu_custom_call.1} parent=1 // pred_check_branch
      %30 = sbr.rel (0) target = $region17
    $region16: #{tpu_custom_call.1} parent=1 // pred_region
      %32 = dma.done [#allocation5], 512
    $region17: #{tpu_custom_call.1} parent=1 // pred_fallthru
      _
    %v33 = vld [vmem:[%s1] sm:$0x3]
    %s34 = sld [smem:[#allocation3]]
    %v35 = vlaneseq
    %v36 = vshrl.u32 %v35, 7
    %v37 = vlaneseq
    %v38 = vand.u32 %v37, 127
    %s39 = smul.u32 0, 2
    %v40 = vstv %s39
    %v41 = vadd.s32 %v36, %v40
    %v42 = vmul.u32 %v41, 32
    %v43 = vadd.s32 %v42, %v38
    %s44 = smul.u32 %s34, 2654435769
    %v45 = vstv %s44
    %v46 = vxor.u32 %v43, %v45
    %v47 = vshrl.u32 %v46, 16
    %v48 = vxor.u32 %v46, %v47
    %v49 = vmul.u32 %v48, 2146121005
    %v50 = vshrl.u32 %v49, 15
    %v51 = vxor.u32 %v49, %v50
    %v52 = vmul.u32 %v51, 2221713035
    %v53 = vshrl.u32 %v52, 16
    %v54 = vxor.u32 %v52, %v53
    %v55 = vadd.s32 %v54, 2147483648
    %vm57 = vcmp.ge.s32.totalorder %v55, 2576980378
    %v58 = vsel %vm57, 1.1111112, 0.0
    %v59 = vmul.f32 %v33, %v58
    %v60 = vld [vmem:[#allocation4] sm:$0xff]
    %v61 = vld [vmem:[#allocation4 + $0x8] sm:$0xff]
    %v62 = vld [vmem:[#allocation4 + $0x10] sm:$0xff]
    %v63 = vld [vmem:[#allocation4 + $0x18] sm:$0xff]
    %v64 = vld [vmem:[%s3] sm:$0x1]
    %v66 = vperm.slane %v64, 0
    %vm68 = vcmask 261120
    %v70 = vsel %vm68, %v59, 0
    %72 = vmatpush.msra.mxu0 0.0
    %73 = vmatpush.msra.mxu0 0.0
    %74 = vmatpush.msra.mxu0 0.0
    %75 = vmatpush.msra.mxu0 0.0
    %76 = vmatpush.msra.mxu0 0.0
    %77 = vmatpush.msra.mxu0 0.0
    %78 = vmatpush.msra.mxu0 0.0
    %79 = vmatpush.msra.mxu0 0.0
    %80 = vmatpush.msra.mxu0 0.0
    %81 = vmatpush.msra.mxu0 0.0
    %82 = vmatpush.msra.mxu0 0.0
    %83 = vmatpush.msra.mxu0 0.0
    %84 = vmatpush.msra.mxu0 %v63
    %85 = vmatpush.msra.mxu0 %v62
    %86 = vmatpush.msra.mxu0 %v61
    %87 = vmatpush.msra.mxu0 %v60
    %88 = vmatmul.f32.gmra.mxu0 %v70
    %v89 = vpop.f32.mrf.mxu0
    %v90 = vadd.f32 %v66, %v89
    %91 = vdwg.mxu0
    %92 = vst [vmem:[#allocation7] sm:$0x3] %v90
    // Predicated region
    $region18: #{tpu_custom_call.1} parent=1 // pred_check
      _
    $region19: #{tpu_custom_call.1} parent=1 // pred_check_branch
      %94 = sbr.rel (0) target = $region21
    $region20: #{tpu_custom_call.1} parent=1 // pred_region
      %96 = vsyncadd [#allocation6], 0
      %s98 = sshll.u32 [#allocation7], 4
      %s99 = int_to_ptr.vmem [resolvable:$true] %s98
      %s100 = sshll.u32 %s4, 4
      %s101 = int_to_ptr.hbm [resolvable:$true] %s100
      %103 = dma.vmem_to_hbm [thread:$0]  %s99, 32, %s101, [#allocation6]
    $region21: #{tpu_custom_call.1} parent=1 // pred_fallthru
      _
    // Predicated region
    $region22: #{tpu_custom_call.1} parent=1 // pred_check
      _
    $region23: #{tpu_custom_call.1} parent=1 // pred_check_branch
      %105 = sbr.rel (0) target = $region25
    $region24: #{tpu_custom_call.1} parent=1 // pred_region
      %107 = dma.done [#allocation6], 32
    $region25: #{tpu_custom_call.1} parent=1 // pred_fallthru
      _
    %108 = vsyncpa [#allocation5], 1
    %109 = vsyncpa [#allocation6], 1

</llo_original>
